<compile_context>
chip_gen: v7x
topology: tpu7x:2x2x1
jax: 0.10.0
libtpu: 0.0.40
codegen_flags: <defaults>
</compile_context>

<pallas_src>
import jax
import jax.numpy as jnp
from jax.experimental import pallas as pl
from jax.experimental.pallas import tpu as pltpu

BN_EPS = 1e-5


def _stats_kernel(x_ref, sx_ref, gram_ref):
    """Accumulate per-channel sum(x) and the Cin x Cin Gram matrix sum(x x^T)."""
    @pl.when(jnp.logical_and(pl.program_id(0) == 0, pl.program_id(1) == 0))
    def _():
        sx_ref[...] = jnp.zeros_like(sx_ref)
        gram_ref[...] = jnp.zeros_like(gram_ref)

    x = x_ref[0]                                      # (Cin, T), lane-dense
    cin = x.shape[0]
    sx_ref[...] += jnp.sum(x, axis=-1, keepdims=True)  # (Cin, 1)
    cols = [jnp.sum(x * x[i:i + 1, :], axis=-1, keepdims=True)
            for i in range(cin)]                       # Cin x (Cin, 1)
    gram_ref[...] += jnp.concatenate(cols, axis=-1)    # (Cin, Cin)


def _norm_kernel(x_ref, w_ref, b_ref, o_ref):
    """out = W_fold @ x + b_fold via unrolled VPU broadcast FMAs (no MXU)."""
    x = x_ref[0]                                      # (Cin, T)
    w = w_ref[...]                                    # (Cout_total, Cin)
    cin = x.shape[0]
    out = w[:, 0:1] * x[0:1, :] + b_ref[...]          # (Cout_total, T)
    for ci in range(1, cin):
        out = out + w[:, ci:ci + 1] * x[ci:ci + 1, :]
    o_ref[0] = out.astype(o_ref.dtype)


def _pick_tile(hw):
    # Largest lane-dense tile (multiple of 128) that divides HW; else full extent.
    for t in (8192, 4096, 2048, 1024, 512, 256, 128):
        if hw % t == 0:
            return t
    return hw


def conv_cat_bn(x_nchw, w1, b1, w2, b2, gamma, beta, eps=BN_EPS):
    """x_nchw: (N, 3, H, W) f32. w1/w2: (10, 3, 1, 1). Returns (N, 20, H, W)."""
    n, cin, h, w = x_nchw.shape
    cout = w1.shape[0]
    ct = 2 * cout
    hw = h * w
    t = _pick_tile(hw)
    n_t = hw // t

    x3 = x_nchw.reshape(n, cin, hw)                   # free reshape, channel-major

    # ---- Pass 1: input statistics --------------------------------------------
    sx, gram = pl.pallas_call(
        _stats_kernel,
        out_shape=(jax.ShapeDtypeStruct((cin, 1), jnp.float32),
                   jax.ShapeDtypeStruct((cin, cin), jnp.float32)),
        grid_spec=pl.GridSpec(
            grid=(n, n_t),
            in_specs=[pl.BlockSpec((1, cin, t), lambda i, j: (i, 0, j))],
            out_specs=(pl.BlockSpec((cin, 1), lambda i, j: (0, 0)),
                       pl.BlockSpec((cin, cin), lambda i, j: (0, 0))),
        ),
        compiler_params=pltpu.CompilerParams(
            dimension_semantics=("arbitrary", "arbitrary")),
    )(x3)

    # ---- Tiny glue math on (3,), (3,3), (20,3) arrays -------------------------
    m = float(n * hw)
    mean_x = sx[:, 0] / m                             # (Cin,)
    exx = gram / m                                    # (Cin, Cin)
    cov_x = exx - jnp.outer(mean_x, mean_x)           # (Cin, Cin)

    w_cat = jnp.concatenate([w1.reshape(cout, cin), w2.reshape(cout, cin)], axis=0)
    b_cat = jnp.concatenate([b1, b2])                 # (20,)

    mean_y = w_cat @ mean_x + b_cat                   # (20,)
    var_y = jnp.einsum('oc,cd,od->o', w_cat, cov_x, w_cat)
    inv_std = jax.lax.rsqrt(jnp.maximum(var_y, 0.0) + eps)
    scale = gamma * inv_std                           # (20,)
    # out = (y - mean_y) * inv_std * gamma + beta  =  y * scale + shift
    w_fold = w_cat * scale[:, None]                   # (20, 3)
    b_fold = scale * (b_cat - mean_y) + beta          # (20,)

    # ---- Pass 2: fused conv + normalize, lane-dense output --------------------
    out3 = pl.pallas_call(
        _norm_kernel,
        out_shape=jax.ShapeDtypeStruct((n, ct, hw), jnp.float32),
        grid_spec=pl.GridSpec(
            grid=(n, n_t),
            in_specs=[pl.BlockSpec((1, cin, t), lambda i, j: (i, 0, j)),
                      pl.BlockSpec((ct, cin), lambda i, j: (0, 0)),
                      pl.BlockSpec((ct, 1), lambda i, j: (0, 0))],
            out_specs=pl.BlockSpec((1, ct, t), lambda i, j: (i, 0, j)),
        ),
        compiler_params=pltpu.CompilerParams(
            dimension_semantics=("parallel", "parallel")),
    )(x3, w_fold, b_fold.reshape(ct, 1))

    return out3.reshape(n, ct, h, w)


if __name__ == "__main__":
    key = jax.random.PRNGKey(0)
    k_x, k_w1, k_b1, k_w2, k_b2, k_g, k_be = jax.random.split(key, 7)

    # Small shapes consistent with the module: N=2, Cin=3, H=W=16 (HW=256 → lane-dense tiles).
    N, CIN, H, W = 2, 3, 16, 16
    COUT = 10

    x = jax.random.normal(k_x, (N, CIN, H, W), dtype=jnp.float32)

    # Conv2d-style uniform init.
    fan_in = CIN * 1 * 1
    bound = 1.0 / (fan_in ** 0.5)
    w1 = jax.random.uniform(k_w1, (COUT, CIN, 1, 1), jnp.float32, -bound, bound)
    b1 = jax.random.uniform(k_b1, (COUT,), jnp.float32, -bound, bound)
    w2 = jax.random.uniform(k_w2, (COUT, CIN, 1, 1), jnp.float32, -bound, bound)
    b2 = jax.random.uniform(k_b2, (COUT,), jnp.float32, -bound, bound)

    # BN affine params (randomized to exercise the scale/shift folding path).
    gamma = jax.random.uniform(k_g, (2 * COUT,), jnp.float32, 0.5, 1.5)
    beta = jax.random.uniform(k_be, (2 * COUT,), jnp.float32, -0.5, 0.5)

    out = conv_cat_bn(x, w1, b1, w2, b2, gamma, beta)
    jax.block_until_ready(out)

    # Plain-JAX reference (direct formulation).
    x_mat = jnp.transpose(x, (0, 2, 3, 1)).reshape(-1, CIN)
    y1 = x_mat @ w1.reshape(COUT, CIN).T + b1
    y2 = x_mat @ w2.reshape(COUT, CIN).T + b2
    y = jnp.concatenate([y1, y2], axis=1)
    mu = y.mean(axis=0, keepdims=True)
    var = ((y - mu) ** 2).mean(axis=0, keepdims=True)
    ref = (y - mu) / jnp.sqrt(var + BN_EPS) * gamma + beta
    ref = jnp.transpose(ref.reshape(N, H, W, 2 * COUT), (0, 3, 1, 2))

    assert out.shape == (N, 2 * COUT, H, W)
    assert jnp.allclose(out, ref, atol=5e-4, rtol=5e-4), (
        "max abs diff = %s" % jnp.max(jnp.abs(out - ref)))

    print("KERNEL_OK")
</pallas_src>

<mosaic_0001>
module attributes {stable_mosaic.version = 11 : i64} {
  func.func @_stats_kernel(%arg0: i32, %arg1: i32, %arg2: memref<1x3x256xf32, #tpu.memory_space<vmem>>, %arg3: memref<3x1xf32, #tpu.memory_space<vmem>>, %arg4: memref<3x3xf32, #tpu.memory_space<vmem>>) attributes {dimension_semantics = [#tpu.dimension_semantics<arbitrary>, #tpu.dimension_semantics<arbitrary>], iteration_bounds = array<i64: 2, 1>, scalar_prefetch = 0 : i64, scratch_operands = 0 : i64, tpu.core_type = #tpu.core_type<tc>, window_params = [{transform_indices = @transform_0, window_bounds = array<i64: 1, 3, 256>}, {pipeline_mode = #tpu.pipeline_mode<synchronous>, transform_indices = @transform_1, window_bounds = array<i64: 3, 1>}, {pipeline_mode = #tpu.pipeline_mode<synchronous>, transform_indices = @transform_2, window_bounds = array<i64: 3, 3>}]} {
    %c0_i32 = arith.constant 0 : i32
    %0 = arith.cmpi eq, %arg0, %c0_i32 : i32
    %c0_i32_0 = arith.constant 0 : i32
    %1 = arith.cmpi eq, %arg1, %c0_i32_0 : i32
    %2 = arith.andi %0, %1 : i1
    %3 = arith.extui %2 : i1 to i32
    %c0_i32_1 = arith.constant 0 : i32
    %4 = arith.cmpi ne, %3, %c0_i32_1 : i32
    scf.if %4 {
      %cst_15 = arith.constant 0.000000e+00 : f32
      %31 = vector.broadcast %cst_15 : f32 to vector<3x1xf32>
      %c0_16 = arith.constant 0 : index
      %c0_17 = arith.constant 0 : index
      %32 = vector.load %arg3[%c0_16, %c0_17] : memref<3x1xf32, #tpu.memory_space<vmem>>, vector<3x1xf32>
      tpu.vector_store %arg3[%c0_16, %c0_17], %31 {strides = array<i32>} : memref<3x1xf32, #tpu.memory_space<vmem>>, vector<3x1xf32>,
      %cst_18 = arith.constant 0.000000e+00 : f32
      %33 = vector.broadcast %cst_18 : f32 to vector<3x3xf32>
      %c0_19 = arith.constant 0 : index
      %c0_20 = arith.constant 0 : index
      %34 = vector.load %arg4[%c0_19, %c0_20] : memref<3x3xf32, #tpu.memory_space<vmem>>, vector<3x3xf32>
      tpu.vector_store %arg4[%c0_19, %c0_20], %33 {strides = array<i32>} : memref<3x3xf32, #tpu.memory_space<vmem>>, vector<3x3xf32>,
    } else {
    }
    %c0 = arith.constant 0 : index
    %c0_2 = arith.constant 0 : index
    %c0_3 = arith.constant 0 : index
    %5 = vector.load %arg2[%c0, %c0_2, %c0_3] : memref<1x3x256xf32, #tpu.memory_space<vmem>>, vector<1x3x256xf32>
    %6 = vector.shape_cast %5 : vector<1x3x256xf32> to vector<3x256xf32>
    %c0_4 = arith.constant 0 : index
    %c0_5 = arith.constant 0 : index
    %7 = vector.load %arg3[%c0_4, %c0_5] : memref<3x1xf32, #tpu.memory_space<vmem>>, vector<3x1xf32>
    %cst = arith.constant dense<0.000000e+00> : vector<3xf32>
    %8 = vector.multi_reduction <add>, %6, %cst [1] : vector<3x256xf32> to vector<3xf32>
    %9 = vector.shape_cast %8 : vector<3xf32> to vector<3x1xf32>
    %10 = arith.addf %7, %9 : vector<3x1xf32>
    %c0_6 = arith.constant 0 : index
    %c0_7 = arith.constant 0 : index
    %11 = vector.load %arg3[%c0_6, %c0_7] : memref<3x1xf32, #tpu.memory_space<vmem>>, vector<3x1xf32>
    tpu.vector_store %arg3[%c0_6, %c0_7], %10 {strides = array<i32>} : memref<3x1xf32, #tpu.memory_space<vmem>>, vector<3x1xf32>,
    %12 = vector.extract_strided_slice %6 {offsets = [0, 0], sizes = [1, 256], strides = [1, 1]} : vector<3x256xf32> to vector<1x256xf32>
    %13 = vector.broadcast %12 : vector<1x256xf32> to vector<3x256xf32>
    %14 = arith.mulf %6, %13 : vector<3x256xf32>
    %cst_8 = arith.constant dense<0.000000e+00> : vector<3xf32>
    %15 = vector.multi_reduction <add>, %14, %cst_8 [1] : vector<3x256xf32> to vector<3xf32>
    %16 = vector.shape_cast %15 : vector<3xf32> to vector<3x1xf32>
    %17 = vector.extract_strided_slice %6 {offsets = [1, 0], sizes = [1, 256], strides = [1, 1]} : vector<3x256xf32> to vector<1x256xf32>
    %18 = vector.broadcast %17 : vector<1x256xf32> to vector<3x256xf32>
    %19 = arith.mulf %6, %18 : vector<3x256xf32>
    %cst_9 = arith.constant dense<0.000000e+00> : vector<3xf32>
    %20 = vector.multi_reduction <add>, %19, %cst_9 [1] : vector<3x256xf32> to vector<3xf32>
    %21 = vector.shape_cast %20 : vector<3xf32> to vector<3x1xf32>
    %22 = vector.extract_strided_slice %6 {offsets = [2, 0], sizes = [1, 256], strides = [1, 1]} : vector<3x256xf32> to vector<1x256xf32>
    %23 = vector.broadcast %22 : vector<1x256xf32> to vector<3x256xf32>
    %24 = arith.mulf %6, %23 : vector<3x256xf32>
    %cst_10 = arith.constant dense<0.000000e+00> : vector<3xf32>
    %25 = vector.multi_reduction <add>, %24, %cst_10 [1] : vector<3x256xf32> to vector<3xf32>
    %26 = vector.shape_cast %25 : vector<3xf32> to vector<3x1xf32>
    %c0_11 = arith.constant 0 : index
    %c0_12 = arith.constant 0 : index
    %27 = vector.load %arg4[%c0_11, %c0_12] : memref<3x3xf32, #tpu.memory_space<vmem>>, vector<3x3xf32>
    %28 = tpu.concatenate %16, %21, %26 in 1 : vector<3x1xf32>, vector<3x1xf32>, vector<3x1xf32> -> vector<3x3xf32>
    %29 = arith.addf %27, %28 : vector<3x3xf32>
    %c0_13 = arith.constant 0 : index
    %c0_14 = arith.constant 0 : index
    %30 = vector.load %arg4[%c0_13, %c0_14] : memref<3x3xf32, #tpu.memory_space<vmem>>, vector<3x3xf32>
    tpu.vector_store %arg4[%c0_13, %c0_14], %29 {strides = array<i32>} : memref<3x3xf32, #tpu.memory_space<vmem>>, vector<3x3xf32>,
    return
  }
  func.func @transform_0(%arg0: i32, %arg1: i32) -> (i32, i32, i32) {
    %c0_i32 = arith.constant 0 : i32
    %c0_i32_0 = arith.constant 0 : i32
    return %arg0, %c0_i32, %arg1 : i32, i32, i32
  }
  func.func @transform_1(%arg0: i32, %arg1: i32) -> (i32, i32) {
    %c0_i32 = arith.constant 0 : i32
    %c0_i32_0 = arith.constant 0 : i32
    %c0_i32_1 = arith.constant 0 : i32
    return %c0_i32, %c0_i32_0 : i32, i32
  }
  func.func @transform_2(%arg0: i32, %arg1: i32) -> (i32, i32) {
    %c0_i32 = arith.constant 0 : i32
    %c0_i32_0 = arith.constant 0 : i32
    %c0_i32_1 = arith.constant 0 : i32
    return %c0_i32, %c0_i32_0 : i32, i32
  }
}

</mosaic_0001>

<llo_original>
// kernel: tpu_custom_call.1
$region0: #{tpu_custom_call.1}
  #allocation0 [shape = 'u32[]', space=smem, size = 0x4, offset = 0x4, fixed_abs, tag = 'smem constant byte address 0x4 - core index']
  #allocation1 [shape = 'u32[144,128]{1,0:T(1,128)}', space=vmem, size = 0x12000, scoped, tag = 'internal scratch']
  %s0 = inlined_call_operand.vmem [shape: f32[2,3,256], index: 0, kind: input, shape index: {}]
  %s1 = inlined_call_operand.vmem [shape: f32[3,1], index: 1, kind: output, shape index: {0}]
  %s2 = inlined_call_operand.hbm [shape: f32[3,3], index: 2, kind: output, shape index: {1}]
  %3 = xla_tuple %s1, %s2
  %s4 = sld [smem:[#allocation0]]
  $region49: #{tpu_custom_call.1} parent=0
    _
  %s6 = ssub.s32 1, %s4
  %s7 = scalar_select 0, %s6, %s4
  $region1: #{tpu_custom_call.1} parent=0
    #allocation2 [shape = 'u8[2048]{0}', space=vmem, size = 0x800, scoped, tag = 'output window, operand 1, single buffered']
    #allocation3 [shape = 's32[2]{0}', space=sflag, size = 0x8, scoped, tag = 'scoped memory for tpu_custom_call.1']
    %8 = vsyncpa [#allocation3], 0
    loop: start=0, step=1, limit=4
    $region2: #{tpu_custom_call.1} parent=1 // loop_pre_header
      _
    $region3: #{tpu_custom_call.1} parent=1 // loop_header
      %s10 = sphi 0, %s14
      %p11 = scmp.ge.s32.totalorder %s10, 4
      %s17 = sphi 0, %s29
      %s18 = sphi 0, %s25
      %s19 = sphi 0, %s17
      %s20 = sphi 0, %s18
      %s21 = sphi 0, %s19
      %s22 = sphi 0, %s20
      %s34 = sphi 0, %s36
      %s37 = sphi 0, %s34
      %s38 = sphi 0, %s37
      %s54 = sphi 0, %s38
      %s58 = sphi 0, %s58
      %s60 = sphi 0, %s58
      %s61 = sphi 0, %s60
      %s75 = sphi 0, %s61
      %s79 = sphi 0, %s79
      %s81 = sphi 0, %s79
      %s82 = sphi 0, %s81
      %s96 = sphi 0, %s82
    $region4: #{tpu_custom_call.1} parent=1 // loop_header_branch
      %13 = sbr.rel (%p11) target = $region8
    $region5: #{tpu_custom_call.1} parent=1 // loop_body
      %s15 = ssub.s32 %s10, 1
      %s16 = ssub.s32 %s10, 2
      %s23 = sadd.s32 1, %s18
      %p24 = scmp.ge.s32.totalorder %s23, 1
      %s25 = scalar_select %p24, 0, %s23
      %s26 = sadd.s32 1, %s17
      %s27 = scalar_select %p24, %s26, %s17
      %p28 = scmp.ge.s32.totalorder %s27, 2
      %s29 = scalar_select %p28, 0, %s27
      %s30 = ssub.s32 %s17, %s29
      %s31 = ssub.s32 %s18, %s25
      %s32 = sor.u32 %s30, %s31
      %p33 = scmp.eq.s32.totalorder %s32, 0
      %s35 = sadd.s32 %s34, 1
      %s36 = scalar_select %p33, %s34, %s35
      %p39 = pneg %p33
      %p40 = scmp.eq.s32.totalorder %s10, 1
      %p41 = por %p39, %p40
      %p42 = scmp.ne.s32.totalorder %s34, %s37
      %p43 = scmp.eq.s32.totalorder %s10, 0
      %p44 = por %p42, %p43
      %p45 = scmp.ne.s32.totalorder %s34, %s37
      %p46 = scmp.eq.s32.totalorder %s15, 1
      %p47 = por %p45, %p46
      %p48 = scmp.ne.s32.totalorder %s37, %s38
      %p49 = scmp.eq.s32.totalorder %s15, 0
      %p50 = por %p48, %p49
      %p51 = scmp.ne.s32.totalorder %s37, %s38
      %p52 = scmp.eq.s32.totalorder %s16, 1
      %p53 = por %p51, %p52
      %p55 = scmp.ne.s32.totalorder %s38, %s54
      %p56 = scmp.eq.s32.totalorder %s16, 0
      %p57 = por %p55, %p56
      %s59 = sadd.s32 %s58, 1
      %p62 = scmp.eq.s32.totalorder %s10, 1
      %p63 = scmp.ne.s32.totalorder %s58, %s60
      %p64 = scmp.eq.s32.totalorder %s10, 0
      %p65 = por %p63, %p64
      %p66 = scmp.ne.s32.totalorder %s58, %s60
      %p67 = scmp.eq.s32.totalorder %s15, 1
      %p68 = por %p66, %p67
      %p69 = scmp.ne.s32.totalorder %s60, %s61
      %p70 = scmp.eq.s32.totalorder %s15, 0
      %p71 = por %p69, %p70
      %p72 = scmp.ne.s32.totalorder %s60, %s61
      %p73 = scmp.eq.s32.totalorder %s16, 1
      %p74 = por %p72, %p73
      %p76 = scmp.ne.s32.totalorder %s61, %s75
      %p77 = scmp.eq.s32.totalorder %s16, 0
      %p78 = por %p76, %p77
      %s80 = sadd.s32 %s79, 1
      %p83 = scmp.eq.s32.totalorder %s10, 1
      %p84 = scmp.ne.s32.totalorder %s79, %s81
      %p85 = scmp.eq.s32.totalorder %s10, 0
      %p86 = por %p84, %p85
      %p87 = scmp.ne.s32.totalorder %s79, %s81
      %p88 = scmp.eq.s32.totalorder %s15, 1
      %p89 = por %p87, %p88
      %p90 = scmp.ne.s32.totalorder %s81, %s82
      %p91 = scmp.eq.s32.totalorder %s15, 0
      %p92 = por %p90, %p91
      %p93 = scmp.ne.s32.totalorder %s81, %s82
      %p94 = scmp.eq.s32.totalorder %s16, 1
      %p95 = por %p93, %p94
      %p97 = scmp.ne.s32.totalorder %s82, %s96
      %p98 = scmp.eq.s32.totalorder %s16, 0
      %p99 = por %p97, %p98
      %p100 = scmp.le.s32.totalorder 1, %s10
      %p101 = scmp.lt.s32.totalorder %s10, 3
      %p102 = pnand %p100, %p101
      %p103 = pneg %p102
      // Predicated region
      $region9: #{tpu_custom_call.1} parent=5 // pred_check
        _
      $region10: #{tpu_custom_call.1} parent=5 // pred_check_branch
        %105 = sbr.rel (%p102) target = $region12
      $region11: #{tpu_custom_call.1} parent=5 // pred_region
        %s106 = ssub.s32 %s10, 1
      $region12: #{tpu_custom_call.1} parent=5 // pred_fallthru
        _
      %p107 = scmp.lt.s32.totalorder %s10, 2
      // Predicated region
      $region13: #{tpu_custom_call.1} parent=5 // pred_check
        %p108 = pneg %p107
      $region14: #{tpu_custom_call.1} parent=5 // pred_check_branch
        %110 = sbr.rel (%p108) target = $region16
      $region15: #{tpu_custom_call.1} parent=5 // pred_region
        // Predicated region
        $region17: #{tpu_custom_call.1} parent=15 // pred_check
          %p111 = pneg %p44
        $region18: #{tpu_custom_call.1} parent=15 // pred_check_branch
          %113 = sbr.rel (%p111) target = $region20
        $region19: #{tpu_custom_call.1} parent=15 // pred_region
          %s114 = smul.u32 2, %s18
          %p115 = scmp.lt.s32.totalorder %s17, 1
          %s116 = scalar_select %p115, %s17, 1
          %p117 = scmp.lt.s32.totalorder %s114, 1
          %s118 = scalar_select %p117, %s114, 1
          %s119 = smul.addr %s116, 2
          %s120 = sadd.s32 %s118, %s119
          %s121 = smul.addr %s120, 4
          %s122 = scalar_lea.vmem %s0, %s121
          %s123 = smul.u32 2, %s18
        $region20: #{tpu_custom_call.1} parent=15 // pred_fallthru
          _
      $region16: #{tpu_custom_call.1} parent=5 // pred_fallthru
        _
      %p124 = scmp.le.s32.totalorder 1, %s10
      %p125 = scmp.lt.s32.totalorder %s10, 3
      %p126 = pnand %p124, %p125
      %p127 = pneg %p126
      // Predicated region
      $region21: #{tpu_custom_call.1} parent=5 // pred_check
        _
      $region22: #{tpu_custom_call.1} parent=5 // pred_check_branch
        %129 = sbr.rel (%p126) target = $region24
      $region23: #{tpu_custom_call.1} parent=5 // pred_region
        %s130 = ssub.s32 %s10, 1
        %s131 = smul.u32 2, %s20
        %p132 = scmp.lt.s32.totalorder %s19, 1
        %s133 = scalar_select %p132, %s19, 1
        %p134 = scmp.lt.s32.totalorder %s131, 1
        %s135 = scalar_select %p134, %s131, 1
        %s136 = smul.addr %s133, 2
        %s137 = sadd.s32 %s135, %s136
        %s138 = smul.addr %s137, 4
        %s139 = scalar_lea.vmem %s0, %s138
        %p140 = pneg %p50
        %p141 = pneg %p47
        %p142 = pneg %p71
        %p143 = pneg %p68
        %p144 = pneg %p92
        %p145 = pneg %p89
        %s146 = smul.u32 2, %s20
        %p147 = scmp.lt.s32.totalorder %s19, 1
        %s148 = scalar_select %p147, %s19, 1
        %p149 = scmp.lt.s32.totalorder %s146, 1
        %s150 = scalar_select %p149, %s146, 1
        %s151 = smul.addr %s148, 2
        %s152 = sadd.s32 %s150, %s151
        %s153 = smul.addr %s152, 4
        %s154 = scalar_lea.vmem %s0, %s153
        %s155 = smul.u32 2, %s20
        %p156 = scmp.eq.s32.totalorder %s19, 0
        %p157 = scmp.eq.s32.totalorder %s20, 0
        %p158 = pnand %p156, %p157
        %p159 = pneg %p158
        // Predicated region
        $region25: #{tpu_custom_call.1} parent=23 // pred_check
          _
        $region26: #{tpu_custom_call.1} parent=23 // pred_check_branch
          %161 = sbr.rel (%p158) target = $region28
        $region27: #{tpu_custom_call.1} parent=23 // pred_region
          %vm162 = vcmask 2048
          %163 = vst.msk [vmem:[%s1] sm:$0x7] %vm162, 0.0
          %vm164 = vcmask 18432
          %165 = vst.msk [vmem:[#allocation2] sm:$0x7] %vm164, 0.0
        $region28: #{tpu_custom_call.1} parent=23 // pred_fallthru
          _
        %v166 = vld [vmem:[%s154] sm:$0x77]
        %v167 = vld [vmem:[%s1] sm:$0x7]
        %v169 = vcombine.high %v166, %v166
        %vm171 = vcmask 1042432
        %v172 = vsel %vm171, %v166, 0.0
        %v173 = vsel %vm171, %v169, 0.0
        %v174 = vadd.f32 %v172, %v173
        %175 = vadd.xlane.f32.xlu0 %v174
        %v176 = vpop.xlane.xlu0 %175
        %v177 = vadd.f32 %v167, %v176
        %vm178 = vcmask 2048
        %179 = vst.msk [vmem:[%s1] sm:$0x7] %vm178, %v177
        %v180 = vlaneseq
        %v181 = vshrl.u32 %v180, 7
        %v182 = vsub.s32 0, %v181
        %v183 = vrot.slane %v166, %v182
        %v184 = vlaneseq
        %v185 = vshrl.u32 %v184, 7
        %v186 = vsub.s32 4, %v185
        %v187 = vrot.slane %v166, %v186
        %v190 = vlaneseq
        %v191 = vshrl.u32 %v190, 7
        %v192 = vsub.s32 0, %v191
        %v193 = vrot.slane %v183, %v192
        %v194 = vlaneseq
        %v195 = vshrl.u32 %v194, 7
        %v196 = vsub.s32 0, %v195
        %v197 = vrot.slane %v187, %v196
        %v200 = vcombine.low %v193, %v197
        %v202 = vmul.f32 %v166, %v200
        %v204 = vcombine.high %v202, %v202
        %v206 = vsel %vm171, %v202, 0.0
        %v207 = vsel %vm171, %v204, 0.0
        %v208 = vadd.f32 %v206, %v207
        %209 = vadd.xlane.f32.xlu0 %v208
        %v210 = vpop.xlane.xlu0 %209
        %v211 = vlaneseq
        %v212 = vshrl.u32 %v211, 7
        %v213 = vsub.s32 1, %v212
        %v214 = vrot.slane %v166, %v213
        %v215 = vlaneseq
        %v216 = vshrl.u32 %v215, 7
        %v217 = vsub.s32 5, %v216
        %v218 = vrot.slane %v166, %v217
        %v221 = vlaneseq
        %v222 = vshrl.u32 %v221, 7
        %v223 = vsub.s32 1, %v222
        %v224 = vrot.slane %v214, %v223
        %v225 = vlaneseq
        %v226 = vshrl.u32 %v225, 7
        %v227 = vsub.s32 1, %v226
        %v228 = vrot.slane %v218, %v227
        %v231 = vcombine.low %v224, %v228
        %v233 = vmul.f32 %v166, %v231
        %v235 = vcombine.high %v233, %v233
        %v237 = vsel %vm171, %v233, 0.0
        %v238 = vsel %vm171, %v235, 0.0
        %v239 = vadd.f32 %v237, %v238
        %240 = vadd.xlane.f32.xlu0 %v239
        %v241 = vpop.xlane.xlu0 %240
        %v242 = vlaneseq
        %v243 = vshrl.u32 %v242, 7
        %v244 = vsub.s32 2, %v243
        %v245 = vrot.slane %v166, %v244
        %v246 = vlaneseq
        %v247 = vshrl.u32 %v246, 7
        %v248 = vsub.s32 6, %v247
        %v249 = vrot.slane %v166, %v248
        %v252 = vlaneseq
        %v253 = vshrl.u32 %v252, 7
        %v254 = vsub.s32 2, %v253
        %v255 = vrot.slane %v245, %v254
        %v256 = vlaneseq
        %v257 = vshrl.u32 %v256, 7
        %v258 = vsub.s32 2, %v257
        %v259 = vrot.slane %v249, %v258
        %v262 = vcombine.low %v255, %v259
        %v264 = vmul.f32 %v166, %v262
        %v266 = vcombine.high %v264, %v264
        %v268 = vsel %vm171, %v264, 0.0
        %v269 = vsel %vm171, %v266, 0.0
        %v270 = vadd.f32 %v268, %v269
        %271 = vadd.xlane.f32.xlu0 %v270
        %v272 = vpop.xlane.xlu0 %271
        %v273 = vld [vmem:[#allocation2] sm:$0x7]
        %vm274 = vcmask 7168
        %v275 = vsel %vm274, %v210, %v241
        %vm276 = vcmask 15360
        %v277 = vsel %vm276, %v275, %v272
        %v278 = vadd.f32 %v273, %v277
        %vm279 = vcmask 18432
        %280 = vst.msk [vmem:[#allocation2] sm:$0x7] %vm279, %v278
        // Predicated region
        $region29: #{tpu_custom_call.1} parent=23 // pred_check
          %p281 = pneg %p68
        $region30: #{tpu_custom_call.1} parent=23 // pred_check_branch
          %283 = sbr.rel (%p281) target = $region32
        $region31: #{tpu_custom_call.1} parent=23 // pred_region
          _
        $region32: #{tpu_custom_call.1} parent=23 // pred_fallthru
          _
        // Predicated region
        $region33: #{tpu_custom_call.1} parent=23 // pred_check
          %p284 = pneg %p89
        $region34: #{tpu_custom_call.1} parent=23 // pred_check_branch
          %286 = sbr.rel (%p284) target = $region36
        $region35: #{tpu_custom_call.1} parent=23 // pred_region
          %s288 = ssub.s32 64, 64
          %289 = vsyncadd [#allocation3], %s288
          %s291 = sshll.u32 [#allocation2], 4
          %s292 = int_to_ptr.vmem [resolvable:$true] %s291
          %294 = dma.vmem_to_hbm [thread:$0]  %s292, 64, %s2, [#allocation3]
        $region36: #{tpu_custom_call.1} parent=23 // pred_fallthru
          _
        // Predicated region
        $region37: #{tpu_custom_call.1} parent=23 // pred_check
          %p295 = pneg %p68
        $region38: #{tpu_custom_call.1} parent=23 // pred_check_branch
          %297 = sbr.rel (%p295) target = $region40
        $region39: #{tpu_custom_call.1} parent=23 // pred_region
          _
        $region40: #{tpu_custom_call.1} parent=23 // pred_fallthru
          _
        // Predicated region
        $region41: #{tpu_custom_call.1} parent=23 // pred_check
          %p298 = pneg %p89
        $region42: #{tpu_custom_call.1} parent=23 // pred_check_branch
          %300 = sbr.rel (%p298) target = $region44
        $region43: #{tpu_custom_call.1} parent=23 // pred_region
          %301 = dma.done [#allocation3], 64
        $region44: #{tpu_custom_call.1} parent=23 // pred_fallthru
          _
      $region24: #{tpu_custom_call.1} parent=5 // pred_fallthru
        _
      %p302 = scmp.le.s32.totalorder 2, %s10
      // Predicated region
      $region45: #{tpu_custom_call.1} parent=5 // pred_check
        %p303 = pneg %p302
      $region46: #{tpu_custom_call.1} parent=5 // pred_check_branch
        %305 = sbr.rel (%p303) target = $region48
      $region47: #{tpu_custom_call.1} parent=5 // pred_region
        %s306 = ssub.s32 %s10, 2
      $region48: #{tpu_custom_call.1} parent=5 // pred_fallthru
        _
    $region6: #{tpu_custom_call.1} parent=1 // loop_footer
      %s14 = sadd.s32 1, %s10
    $region7: #{tpu_custom_call.1} parent=1 // loop_footer_branch
      %9 = sbr.rel target = $region3
    $region8: #{tpu_custom_call.1} parent=1 // loop_exit
      _
    %307 = vsyncpa [#allocation3], 1
    %s308 = scalar_lea.sflag [#allocation3], 1
    %309 = vsyncpa %s308, 1

</llo_original>
